<compile_context>
chip_gen: v6e
topology: v6e:2x2x1
jax: 0.10.0
libtpu: 0.0.40
codegen_flags: <defaults>
</compile_context>

<pallas_src>
import jax
import jax.numpy as jnp
from jax.experimental import pallas as pl
from jax.experimental.pallas import tpu as pltpu


def _dice_kernel(p_ref, t_ref, o_ref, acc_pt, acc_ps):
    """Grid body.

    p_ref, t_ref : VMEM blocks (tb, 1, tr, LANE), input dtype (channel 0 only)
    o_ref        : SMEM (1,) float32 -> final dice loss
    acc_pt       : VMEM f32 accumulator for p * t   ((8, LANE) or block-shaped)
    acc_ps       : VMEM f32 accumulator for p + t   (fused sum(p) + sum(t))
    """
    b = pl.program_id(0)
    r = pl.program_id(1)

    @pl.when(jnp.logical_and(b == 0, r == 0))
    def _init():
        acc_pt[...] = jnp.zeros_like(acc_pt)
        acc_ps[...] = jnp.zeros_like(acc_ps)

    # Upcast inside the kernel (no HBM pre-pass in the wrapper).
    p = p_ref[...].astype(jnp.float32)
    t = t_ref[...].astype(jnp.float32)
    pt = p * t
    ps = p + t

    if len(acc_pt.shape) == len(p_ref.shape):
        # Small-block path: block-shaped accumulators, direct VPU += .
        acc_pt[...] += pt
        acc_ps[...] += ps
    else:
        # Grouped path: fold the block into (groups, 8, LANE) and reduce the
        # leading axis — pure vreg-wise VPU adds (no XLU), then a tiny
        # (8, LANE) read-modify-write.  tr % 8 == 0 keeps the reshape inside
        # (8, 128) tiles.
        acc_rows, lane = acc_pt.shape
        rows = pt.shape[0] * pt.shape[2]           # tb * tr (static)
        acc_pt[...] += pt.reshape(rows // acc_rows, acc_rows, lane).sum(axis=0)
        acc_ps[...] += ps.reshape(rows // acc_rows, acc_rows, lane).sum(axis=0)

    @pl.when(jnp.logical_and(b == pl.num_programs(0) - 1,
                             r == pl.num_programs(1) - 1))
    def _finalize():
        smooth = jnp.float32(1.0)
        inter = jnp.sum(acc_pt[...])               # single XLU reduce at the end
        sums = jnp.sum(acc_ps[...])                # sum(p) + sum(t), fused
        dsc = (2.0 * inter + smooth) / (sums + smooth)
        o_ref[0] = 1.0 - dsc


def _vmem_limit_bytes():
    """Generation-aware scoped-VMEM limit with headroom under physical VMEM."""
    try:
        cap = getattr(pltpu.get_tpu_info(), "vmem_capacity_bytes", None)
    except Exception:
        cap = None
    if cap is None:
        cap = 64 << 20                              # conservative default
    if cap <= (64 << 20):                           # v7x-class: 64 MiB physical / TC
        return 48 << 20
    return 64 << 20                                 # v5e / v6e: 128 MiB physical


def _choose_layout(B, C, H, W, itemsize, block_budget):
    """Pick (LANE, R, tb, tr) for the view (B, C, R, LANE).

    Fast path: LANE is a multiple of 128 dividing L = H*W (lane-dense, unit
    stride).  Fallback (L has no 128-multiple divisor): keep (H, W) with the
    full-extent W as the lane dim.  Tiles are exact divisors (no masking);
    tr is a multiple of 8 or the full extent R.  block_budget is counted in
    *input-dtype* bytes so per-step HBM traffic stays >> per-step overhead.
    """
    L = H * W
    lane = 0
    for cand in (512, 384, 256, 128):
        if L % cand == 0:
            lane = cand
            break
    if lane:
        R = L // lane
    else:
        lane, R = W, H                              # fallback: original (H, W) view

    row_bytes = lane * itemsize

    if B * R * row_bytes <= block_budget:           # everything in one block
        return lane, R, B, R
    if R * row_bytes <= block_budget:               # whole plane fits; tile batch
        tb = 1
        for d in range(1, B + 1):
            if B % d == 0 and d * R * row_bytes <= block_budget:
                tb = d
        return lane, R, tb, R
    # Plane too big for one block: one batch element per block, split R into
    # sublane-aligned (multiple-of-8) divisors.
    tr = 0
    for d in range(8, R + 1, 8):                    # largest 8-aligned divisor in budget
        if R % d == 0 and d * row_bytes <= block_budget:
            tr = d
    if tr == 0:                                     # none fits: smallest legal one
        for d in range(8, R + 1, 8):
            if R % d == 0:
                tr = d
                break
    if tr == 0:                                     # no 8-aligned divisor at all
        tr = R                                      # full extent (legal block)
    return lane, R, 1, tr


def dice_loss(y_pred: jax.Array, y_true: jax.Array) -> jax.Array:
    """Pallas implementation of DiceLoss.forward (NCHW inputs, channel 0)."""
    assert y_pred.shape == y_true.shape
    B, C, H, W = y_pred.shape
    itemsize = jnp.dtype(y_pred.dtype).itemsize

    vmem_limit = _vmem_limit_bytes()
    # ~4 MiB/block on 64-MiB-VMEM parts, ~6 MiB on 128-MiB parts (input dtype).
    block_budget = (6 << 20) if vmem_limit >= (64 << 20) else (4 << 20)

    lane, R, tb, tr = _choose_layout(B, C, H, W, itemsize, block_budget)
    nb, nr = B // tb, R // tr
    rows = tb * tr

    # Free metadata reshape of the contiguous NCHW tensors (no HBM pass).
    yp = y_pred.reshape(B, C, R, lane)
    yt = y_true.reshape(B, C, R, lane)

    block = (tb, 1, tr, lane)
    idx_map = lambda b, r: (b, 0, r, 0)             # channel block pinned to 0

    # Shrunken (8, LANE) accumulators when the block folds cleanly into
    # (groups, 8, LANE); otherwise (tiny inputs) keep block-shaped accs.
    if lane % 128 == 0 and rows % 8 == 0:
        acc_shape = (8, lane)
    else:
        acc_shape = block

    out = pl.pallas_call(
        _dice_kernel,
        out_shape=jax.ShapeDtypeStruct((1,), jnp.float32),
        grid_spec=pltpu.PrefetchScalarGridSpec(
            num_scalar_prefetch=0,
            grid=(nb, nr),
            in_specs=[
                pl.BlockSpec(block, idx_map),
                pl.BlockSpec(block, idx_map),
            ],
            out_specs=pl.BlockSpec(memory_space=pltpu.SMEM),
            scratch_shapes=[
                pltpu.VMEM(acc_shape, jnp.float32),   # acc for p * t
                pltpu.VMEM(acc_shape, jnp.float32),   # acc for p + t
            ],
        ),
        compiler_params=pltpu.CompilerParams(
            # Single sequential, race-free reduction over both grid axes.
            dimension_semantics=("arbitrary", "arbitrary"),
            vmem_limit_bytes=int(vmem_limit),
        ),
    )(yp, yt)
    return out[0]


def dice_loss_ref(y_pred, y_true):
    """Pure-JAX reference mirroring the PyTorch module exactly."""
    smooth = 1.0
    p = y_pred[:, 0].reshape(-1)
    t = y_true[:, 0].reshape(-1)
    inter = jnp.sum(p * t)
    dsc = (2.0 * inter + smooth) / (jnp.sum(p) + jnp.sum(t) + smooth)
    return 1.0 - dsc


if __name__ == "__main__":
    key = jax.random.PRNGKey(0)
    k1, k2, k3, k4 = jax.random.split(key, 4)

    # Case 1: small NCHW shape consistent with the module (exercises the
    # small-block path with block-shaped accumulators).
    shape1 = (2, 4, 16, 16)
    yp1 = jax.nn.sigmoid(jax.random.normal(k1, shape1, dtype=jnp.float32))
    yt1 = (jax.random.uniform(k2, shape1, dtype=jnp.float32) > 0.5).astype(jnp.float32)
    out1 = jax.block_until_ready(dice_loss(yp1, yt1))
    ref1 = jax.block_until_ready(dice_loss_ref(yp1, yt1))
    assert jnp.allclose(out1, ref1, rtol=1e-5, atol=1e-6), (out1, ref1)

    # Case 2: exercises the lane-dense flattened path with the shrunken
    # (8, LANE) grouped accumulators (L = 4096 -> LANE = 512, rows = 16).
    shape2 = (2, 3, 64, 64)
    yp2 = jax.nn.sigmoid(jax.random.normal(k3, shape2, dtype=jnp.float32))
    yt2 = (jax.random.uniform(k4, shape2, dtype=jnp.float32) > 0.5).astype(jnp.float32)
    out2 = jax.block_until_ready(dice_loss(yp2, yt2))
    ref2 = jax.block_until_ready(dice_loss_ref(yp2, yt2))
    assert jnp.allclose(out2, ref2, rtol=1e-5, atol=1e-6), (out2, ref2)

    print("KERNEL_OK")
</pallas_src>

<mosaic_0001>
module attributes {stable_mosaic.version = 11 : i64} {
  func.func @_dice_kernel(%arg0: i32, %arg1: i32, %arg2: memref<2x1x1x256xf32, #tpu.memory_space<vmem>>, %arg3: memref<2x1x1x256xf32, #tpu.memory_space<vmem>>, %arg4: memref<1xf32, #tpu.memory_space<smem>>, %arg5: memref<2x1x1x256xf32, #tpu.memory_space<vmem>>, %arg6: memref<2x1x1x256xf32, #tpu.memory_space<vmem>>) attributes {dimension_semantics = [#tpu.dimension_semantics<arbitrary>, #tpu.dimension_semantics<arbitrary>], iteration_bounds = array<i64: 1, 1>, scalar_prefetch = 0 : i64, scratch_operands = 2 : i64, tpu.core_type = #tpu.core_type<tc>, window_params = [{transform_indices = @transform_0, window_bounds = array<i64: 2, 1, 1, 256>}, {transform_indices = @transform_1, window_bounds = array<i64: 2, 1, 1, 256>}, {transform_indices = @transform_2, window_bounds = array<i64: 1>}]} {
    %c0_i32 = arith.constant 0 : i32
    %0 = arith.cmpi eq, %arg0, %c0_i32 : i32
    %c0_i32_0 = arith.constant 0 : i32
    %1 = arith.cmpi eq, %arg1, %c0_i32_0 : i32
    %2 = arith.andi %0, %1 : i1
    %3 = arith.extui %2 : i1 to i32
    %c0_i32_1 = arith.constant 0 : i32
    %4 = arith.cmpi ne, %3, %c0_i32_1 : i32
    scf.if %4 {
      %cst = arith.constant 0.000000e+00 : f32
      %20 = vector.broadcast %cst : f32 to vector<2x1x1x256xf32>
      %c0_28 = arith.constant 0 : index
      %c0_29 = arith.constant 0 : index
      %c0_30 = arith.constant 0 : index
      %c0_31 = arith.constant 0 : index
      %21 = vector.load %arg5[%c0_28, %c0_29, %c0_30, %c0_31] : memref<2x1x1x256xf32, #tpu.memory_space<vmem>>, vector<2x1x1x256xf32>
      tpu.vector_store %arg5[%c0_28, %c0_29, %c0_30, %c0_31], %20 {strides = array<i32>} : memref<2x1x1x256xf32, #tpu.memory_space<vmem>>, vector<2x1x1x256xf32>,
      %cst_32 = arith.constant 0.000000e+00 : f32
      %22 = vector.broadcast %cst_32 : f32 to vector<2x1x1x256xf32>
      %c0_33 = arith.constant 0 : index
      %c0_34 = arith.constant 0 : index
      %c0_35 = arith.constant 0 : index
      %c0_36 = arith.constant 0 : index
      %23 = vector.load %arg6[%c0_33, %c0_34, %c0_35, %c0_36] : memref<2x1x1x256xf32, #tpu.memory_space<vmem>>, vector<2x1x1x256xf32>
      tpu.vector_store %arg6[%c0_33, %c0_34, %c0_35, %c0_36], %22 {strides = array<i32>} : memref<2x1x1x256xf32, #tpu.memory_space<vmem>>, vector<2x1x1x256xf32>,
    } else {
    }
    %c0 = arith.constant 0 : index
    %c0_2 = arith.constant 0 : index
    %c0_3 = arith.constant 0 : index
    %c0_4 = arith.constant 0 : index
    %5 = vector.load %arg2[%c0, %c0_2, %c0_3, %c0_4] : memref<2x1x1x256xf32, #tpu.memory_space<vmem>>, vector<2x1x1x256xf32>
    %c0_5 = arith.constant 0 : index
    %c0_6 = arith.constant 0 : index
    %c0_7 = arith.constant 0 : index
    %c0_8 = arith.constant 0 : index
    %6 = vector.load %arg3[%c0_5, %c0_6, %c0_7, %c0_8] : memref<2x1x1x256xf32, #tpu.memory_space<vmem>>, vector<2x1x1x256xf32>
    %7 = arith.mulf %5, %6 : vector<2x1x1x256xf32>
    %8 = arith.addf %5, %6 : vector<2x1x1x256xf32>
    %c0_9 = arith.constant 0 : index
    %c0_10 = arith.constant 0 : index
    %c0_11 = arith.constant 0 : index
    %c0_12 = arith.constant 0 : index
    %9 = vector.load %arg5[%c0_9, %c0_10, %c0_11, %c0_12] : memref<2x1x1x256xf32, #tpu.memory_space<vmem>>, vector<2x1x1x256xf32>
    %10 = arith.addf %9, %7 : vector<2x1x1x256xf32>
    %c0_13 = arith.constant 0 : index
    %c0_14 = arith.constant 0 : index
    %c0_15 = arith.constant 0 : index
    %c0_16 = arith.constant 0 : index
    %11 = vector.load %arg5[%c0_13, %c0_14, %c0_15, %c0_16] : memref<2x1x1x256xf32, #tpu.memory_space<vmem>>, vector<2x1x1x256xf32>
    tpu.vector_store %arg5[%c0_13, %c0_14, %c0_15, %c0_16], %10 {strides = array<i32>} : memref<2x1x1x256xf32, #tpu.memory_space<vmem>>, vector<2x1x1x256xf32>,
    %c0_17 = arith.constant 0 : index
    %c0_18 = arith.constant 0 : index
    %c0_19 = arith.constant 0 : index
    %c0_20 = arith.constant 0 : index
    %12 = vector.load %arg6[%c0_17, %c0_18, %c0_19, %c0_20] : memref<2x1x1x256xf32, #tpu.memory_space<vmem>>, vector<2x1x1x256xf32>
    %13 = arith.addf %12, %8 : vector<2x1x1x256xf32>
    %c0_21 = arith.constant 0 : index
    %c0_22 = arith.constant 0 : index
    %c0_23 = arith.constant 0 : index
    %c0_24 = arith.constant 0 : index
    %14 = vector.load %arg6[%c0_21, %c0_22, %c0_23, %c0_24] : memref<2x1x1x256xf32, #tpu.memory_space<vmem>>, vector<2x1x1x256xf32>
    tpu.vector_store %arg6[%c0_21, %c0_22, %c0_23, %c0_24], %13 {strides = array<i32>} : memref<2x1x1x256xf32, #tpu.memory_space<vmem>>, vector<2x1x1x256xf32>,
    %c0_i32_25 = arith.constant 0 : i32
    %15 = arith.cmpi eq, %arg0, %c0_i32_25 : i32
    %c0_i32_26 = arith.constant 0 : i32
    %16 = arith.cmpi eq, %arg1, %c0_i32_26 : i32
    %17 = arith.andi %15, %16 : i1
    %18 = arith.extui %17 : i1 to i32
    %c0_i32_27 = arith.constant 0 : i32
    %19 = arith.cmpi ne, %18, %c0_i32_27 : i32
    scf.if %19 {
      %c0_28 = arith.constant 0 : index
      %c0_29 = arith.constant 0 : index
      %c0_30 = arith.constant 0 : index
      %c0_31 = arith.constant 0 : index
      %20 = vector.load %arg5[%c0_28, %c0_29, %c0_30, %c0_31] : memref<2x1x1x256xf32, #tpu.memory_space<vmem>>, vector<2x1x1x256xf32>
      %21 = vector.shape_cast %20 : vector<2x1x1x256xf32> to vector<1x2x1x1x256xf32>
      %cst = arith.constant dense<0.000000e+00> : vector<1xf32>
      %22 = vector.multi_reduction <add>, %21, %cst [1, 2, 3, 4] : vector<1x2x1x1x256xf32> to vector<1xf32>
      %23 = vector.shape_cast %22 : vector<1xf32> to vector<1x1x1x1x1xf32>
      %24 = vector.extract %23[0, 0, 0, 0, 0] : f32 from vector<1x1x1x1x1xf32>
      %c0_32 = arith.constant 0 : index
      %c0_33 = arith.constant 0 : index
      %c0_34 = arith.constant 0 : index
      %c0_35 = arith.constant 0 : index
      %25 = vector.load %arg6[%c0_32, %c0_33, %c0_34, %c0_35] : memref<2x1x1x256xf32, #tpu.memory_space<vmem>>, vector<2x1x1x256xf32>
      %26 = vector.shape_cast %25 : vector<2x1x1x256xf32> to vector<1x2x1x1x256xf32>
      %cst_36 = arith.constant dense<0.000000e+00> : vector<1xf32>
      %27 = vector.multi_reduction <add>, %26, %cst_36 [1, 2, 3, 4] : vector<1x2x1x1x256xf32> to vector<1xf32>
      %28 = vector.shape_cast %27 : vector<1xf32> to vector<1x1x1x1x1xf32>
      %29 = vector.extract %28[0, 0, 0, 0, 0] : f32 from vector<1x1x1x1x1xf32>
      %cst_37 = arith.constant 2.000000e+00 : f32
      %30 = arith.mulf %cst_37, %24 : f32
      %cst_38 = arith.constant 1.000000e+00 : f32
      %31 = arith.addf %30, %cst_38 : f32
      %cst_39 = arith.constant 1.000000e+00 : f32
      %32 = arith.addf %29, %cst_39 : f32
      %33 = arith.divf %31, %32 : f32
      %cst_40 = arith.constant 1.000000e+00 : f32
      %34 = arith.subf %cst_40, %33 : f32
      %c0_41 = arith.constant 0 : index
      %35 = memref.load %arg4[%c0_41] : memref<1xf32, #tpu.memory_space<smem>>
      memref.store %34, %arg4[%c0_41] : memref<1xf32, #tpu.memory_space<smem>>
    } else {
    }
    return
  }
  func.func @transform_0(%arg0: i32, %arg1: i32) -> (i32, i32, i32, i32) {
    %c0_i32 = arith.constant 0 : i32
    %c0_i32_0 = arith.constant 0 : i32
    %c0_i32_1 = arith.constant 0 : i32
    return %arg0, %c0_i32, %arg1, %c0_i32_0 : i32, i32, i32, i32
  }
  func.func @transform_1(%arg0: i32, %arg1: i32) -> (i32, i32, i32, i32) {
    %c0_i32 = arith.constant 0 : i32
    %c0_i32_0 = arith.constant 0 : i32
    %c0_i32_1 = arith.constant 0 : i32
    return %arg0, %c0_i32, %arg1, %c0_i32_0 : i32, i32, i32, i32
  }
  func.func @transform_2(%arg0: i32, %arg1: i32) -> i32 {
    %c0_i32 = arith.constant 0 : i32
    %c0_i32_0 = arith.constant 0 : i32
    return %c0_i32 : i32
  }
}

</mosaic_0001>

<llo_original>
// kernel: tpu_custom_call.1
$region0: #{tpu_custom_call.1}
  #allocation0 [shape = 'u32[]', space=smem, size = 0x4, offset = 0x4, fixed_abs, tag = 'smem constant byte address 0x4 - core index']
  #allocation1 [shape = 'u32[144,128]{1,0:T(1,128)}', space=vmem, size = 0x12000, scoped, tag = 'internal scratch']
  #allocation2 [shape = 'f32[2,1,1,256]{3,2,1,0:T(1,128)}', space=vmem, size = 0x800, scoped, tag = 'scratch operand']
  #allocation3 [shape = 'f32[2,1,1,256]{3,2,1,0:T(1,128)}', space=vmem, size = 0x800, scoped, tag = 'scratch operand']
  %s0 = inlined_call_operand.hbm [shape: f32[2,4,1,256], index: 0, kind: input, shape index: {}]
  %s1 = inlined_call_operand.hbm [shape: f32[2,4,1,256], index: 1, kind: input, shape index: {}]
  %s2 = inlined_call_operand.hbm [shape: f32[1], index: 2, kind: output, shape index: {}]
  %s3 = sld [smem:[#allocation0]]
  $region34: #{tpu_custom_call.1} parent=0
    _
  %s5 = ssub.s32 1, %s3
  %s6 = scalar_select 0, %s5, %s3
  $region1: #{tpu_custom_call.1} parent=0
    #allocation4 [shape = 'u8[2048]{0}', space=vmem, size = 0x800, scoped, tag = 'input window, operand 0, single buffered']
    #allocation5 [shape = 's32[1]{0}', space=sflag, size = 0x4, scoped, tag = 'scoped memory for tpu_custom_call.1']
    #allocation6 [shape = 's32[1]{0}', space=sflag, size = 0x4, scoped, tag = 'scoped memory for tpu_custom_call.1']
    #allocation7 [shape = 'u8[2048]{0}', space=vmem, size = 0x800, scoped, tag = 'input window, operand 1, single buffered']
    #allocation8 [shape = 's32[1]{0}', space=sflag, size = 0x4, scoped, tag = 'scoped memory for tpu_custom_call.1']
    #allocation9 [shape = 'u8[512]{0}', space=smem, size = 0x200, scoped, tag = 'output window, operand 0, single buffered']
    %7 = vsyncpa [#allocation5], 0
    %8 = vsyncpa [#allocation8], 0
    %9 = vsyncpa [#allocation6], 0
    // Predicated region
    $region2: #{tpu_custom_call.1} parent=1 // pred_check
      _
    $region3: #{tpu_custom_call.1} parent=1 // pred_check_branch
      %11 = sbr.rel (0) target = $region5
    $region4: #{tpu_custom_call.1} parent=1 // pred_region
      %s13 = ssub.s32 64, 64
      %14 = vsyncadd [#allocation5], %s13
      %s15 = sshll.u32 [#allocation4], 4
      %s16 = int_to_ptr.vmem [resolvable:$true] %s15
      %21 = dma.hbm_to_vmem [thread:$0]  %s0, 64, %s16, [#allocation5], 128, 32, 2
    $region5: #{tpu_custom_call.1} parent=1 // pred_fallthru
      _
    // Predicated region
    $region6: #{tpu_custom_call.1} parent=1 // pred_check
      _
    $region7: #{tpu_custom_call.1} parent=1 // pred_check_branch
      %23 = sbr.rel (0) target = $region9
    $region8: #{tpu_custom_call.1} parent=1 // pred_region
      %s25 = ssub.s32 64, 64
      %26 = vsyncadd [#allocation8], %s25
      %s27 = sshll.u32 [#allocation7], 4
      %s28 = int_to_ptr.vmem [resolvable:$true] %s27
      %33 = dma.hbm_to_vmem [thread:$0]  %s1, 64, %s28, [#allocation8], 128, 32, 2
    $region9: #{tpu_custom_call.1} parent=1 // pred_fallthru
      _
    // Predicated region
    $region10: #{tpu_custom_call.1} parent=1 // pred_check
      _
    $region11: #{tpu_custom_call.1} parent=1 // pred_check_branch
      %35 = sbr.rel (0) target = $region13
    $region12: #{tpu_custom_call.1} parent=1 // pred_region
      %36 = dma.done [#allocation5], 64
    $region13: #{tpu_custom_call.1} parent=1 // pred_fallthru
      _
    // Predicated region
    $region14: #{tpu_custom_call.1} parent=1 // pred_check
      _
    $region15: #{tpu_custom_call.1} parent=1 // pred_check_branch
      %38 = sbr.rel (0) target = $region17
    $region16: #{tpu_custom_call.1} parent=1 // pred_region
      %39 = dma.done [#allocation8], 64
    $region17: #{tpu_custom_call.1} parent=1 // pred_fallthru
      _
    %p40 = scmp.eq.s32.totalorder 0, 0
    %p41 = scmp.eq.s32.totalorder 0, 0
    %p42 = pnand %p40, %p41
    %p43 = pneg %p42
    // Predicated region
    $region18: #{tpu_custom_call.1} parent=1 // pred_check
      _
    $region19: #{tpu_custom_call.1} parent=1 // pred_check_branch
      %45 = sbr.rel (%p42) target = $region21
    $region20: #{tpu_custom_call.1} parent=1 // pred_region
      %v46 = vlaneseq
      %vm47 = vcmp.ge.s32.totalorder %v46, 0
      %vm48 = vcmp.lt.s32.totalorder %v46, 256
      %vm49 = vmand %vm47, %vm48
      %50 = vst.msk [vmem:[#allocation2] sm:$0x3] %vm49, 0.0
      %51 = vst.msk [vmem:[#allocation2 + $0x2] sm:$0x3] %vm49, 0.0
      %52 = vst.msk [vmem:[#allocation3] sm:$0x3] %vm49, 0.0
      %53 = vst.msk [vmem:[#allocation3 + $0x2] sm:$0x3] %vm49, 0.0
    $region21: #{tpu_custom_call.1} parent=1 // pred_fallthru
      _
    %v54 = vld [vmem:[#allocation4] sm:$0x3]
    %v55 = vld [vmem:[#allocation4 + $0x2] sm:$0x3]
    %v56 = vld [vmem:[#allocation7] sm:$0x3]
    %v57 = vld [vmem:[#allocation7 + $0x2] sm:$0x3]
    %v58 = vmul.f32 %v54, %v56
    %v59 = vmul.f32 %v55, %v57
    %v60 = vadd.f32 %v54, %v56
    %v61 = vadd.f32 %v55, %v57
    %v62 = vld [vmem:[#allocation2] sm:$0x3]
    %v63 = vld [vmem:[#allocation2 + $0x2] sm:$0x3]
    %v64 = vadd.f32 %v62, %v58
    %v65 = vadd.f32 %v63, %v59
    %v66 = vlaneseq
    %vm67 = vcmp.ge.s32.totalorder %v66, 0
    %vm68 = vcmp.lt.s32.totalorder %v66, 256
    %vm69 = vmand %vm67, %vm68
    %70 = vst.msk [vmem:[#allocation2] sm:$0x3] %vm69, %v64
    %71 = vst.msk [vmem:[#allocation2 + $0x2] sm:$0x3] %vm69, %v65
    %v72 = vld [vmem:[#allocation3] sm:$0x3]
    %v73 = vld [vmem:[#allocation3 + $0x2] sm:$0x3]
    %v74 = vadd.f32 %v72, %v60
    %v75 = vadd.f32 %v73, %v61
    %76 = vst.msk [vmem:[#allocation3] sm:$0x3] %vm69, %v74
    %77 = vst.msk [vmem:[#allocation3 + $0x2] sm:$0x3] %vm69, %v75
    // Predicated region
    $region22: #{tpu_custom_call.1} parent=1 // pred_check
      _
    $region23: #{tpu_custom_call.1} parent=1 // pred_check_branch
      %79 = sbr.rel (%p42) target = $region25
    $region24: #{tpu_custom_call.1} parent=1 // pred_region
      %v80 = vld [vmem:[#allocation2] sm:$0x3]
      %v81 = vld [vmem:[#allocation2 + $0x2] sm:$0x3]
      %v84 = vlaneseq
      %v85 = vshrl.u32 %v84, 7
      %v86 = vsub.s32 0, %v85
      %v87 = vrot.slane %v80, %v86
      %v88 = vlaneseq
      %v89 = vshrl.u32 %v88, 7
      %v90 = vsub.s32 1, %v89
      %v91 = vrot.slane %v80, %v90
      %v92 = vlaneseq
      %v93 = vshrl.u32 %v92, 7
      %v94 = vsub.s32 0, %v93
      %v95 = vrot.slane %v81, %v94
      %v96 = vlaneseq
      %v97 = vshrl.u32 %v96, 7
      %v98 = vsub.s32 1, %v97
      %v99 = vrot.slane %v81, %v98
      %vm104 = vcmask 1040384
      %v105 = vsel %vm104, %v87, 0.0
      %v106 = vsel %vm104, %v91, 0.0
      %v107 = vadd.f32 %v105, %v106
      %v108 = vsel %vm104, %v95, 0.0
      %v109 = vadd.f32 %v107, %v108
      %v110 = vsel %vm104, %v99, 0.0
      %v111 = vadd.f32 %v109, %v110
      %112 = vadd.xlane.f32.xlu0 %v111
      %v113 = vpop.xlane.xlu0 %112
      %v114 = vrot.slane %v113, 4
      %v115 = vadd.f32 %v113, %v114
      %v116 = vrot.slane %v115, 2
      %v117 = vadd.f32 %v115, %v116
      %v118 = vrot.slane %v117, 1
      %v119 = vadd.f32 %v117, %v118
      %s120 = vtos %v119
      %v121 = vld [vmem:[#allocation3] sm:$0x3]
      %v122 = vld [vmem:[#allocation3 + $0x2] sm:$0x3]
      %v125 = vlaneseq
      %v126 = vshrl.u32 %v125, 7
      %v127 = vsub.s32 0, %v126
      %v128 = vrot.slane %v121, %v127
      %v129 = vlaneseq
      %v130 = vshrl.u32 %v129, 7
      %v131 = vsub.s32 1, %v130
      %v132 = vrot.slane %v121, %v131
      %v133 = vlaneseq
      %v134 = vshrl.u32 %v133, 7
      %v135 = vsub.s32 0, %v134
      %v136 = vrot.slane %v122, %v135
      %v137 = vlaneseq
      %v138 = vshrl.u32 %v137, 7
      %v139 = vsub.s32 1, %v138
      %v140 = vrot.slane %v122, %v139
      %v145 = vsel %vm104, %v128, 0.0
      %v146 = vsel %vm104, %v132, 0.0
      %v147 = vadd.f32 %v145, %v146
      %v148 = vsel %vm104, %v136, 0.0
      %v149 = vadd.f32 %v147, %v148
      %v150 = vsel %vm104, %v140, 0.0
      %v151 = vadd.f32 %v149, %v150
      %152 = vadd.xlane.f32.xlu0 %v151
      %v153 = vpop.xlane.xlu0 %152
      %v154 = vrot.slane %v153, 4
      %v155 = vadd.f32 %v153, %v154
      %v156 = vrot.slane %v155, 2
      %v157 = vadd.f32 %v155, %v156
      %v158 = vrot.slane %v157, 1
      %v159 = vadd.f32 %v157, %v158
      %s160 = vtos %v159
      %s161 = smul.f32 %s120, 2.0
      %s162 = sadd.f32 %s161, 1.0
      %s163 = sadd.f32 %s160, 1.0
      %v164 = vstv %s163
      %v165 = vrcp.pop %v164
      %s166 = vtos %v165
      %s167 = smul.f32 %s162, %s166
      %s168 = ssub.f32 1.0, %s167
      %s169 = scalar_lea.smem [#allocation9], 0
      %170 = sst [smem:[%s169]] %s168
    $region25: #{tpu_custom_call.1} parent=1 // pred_fallthru
      _
    // Predicated region
    $region26: #{tpu_custom_call.1} parent=1 // pred_check
      _
    $region27: #{tpu_custom_call.1} parent=1 // pred_check_branch
      %172 = sbr.rel (0) target = $region29
    $region28: #{tpu_custom_call.1} parent=1 // pred_region
      %s174 = ssub.s32 16, 16
      %175 = vsyncadd [#allocation6], %s174
      %178 = dma.smem_to_hbm [#allocation9], 16, %s2, [#allocation6]
    $region29: #{tpu_custom_call.1} parent=1 // pred_fallthru
      _
    // Predicated region
    $region30: #{tpu_custom_call.1} parent=1 // pred_check
      _
    $region31: #{tpu_custom_call.1} parent=1 // pred_check_branch
      %180 = sbr.rel (0) target = $region33
    $region32: #{tpu_custom_call.1} parent=1 // pred_region
      %181 = dma.done [#allocation6], 16
    $region33: #{tpu_custom_call.1} parent=1 // pred_fallthru
      _
    %182 = sfence
    %183 = vsyncpa [#allocation5], 1
    %184 = vsyncpa [#allocation8], 1
    %185 = vsyncpa [#allocation6], 1

</llo_original>
